<compile_context>
chip_gen: v5e
topology: v5e:2x2
jax: 0.10.0
libtpu: 0.0.40
codegen_flags: <defaults>
</compile_context>

<pallas_src>
from functools import partial

import jax
import jax.numpy as jnp
from jax import lax
from jax.experimental import pallas as pl
from jax.experimental.pallas import tpu as pltpu

LEAKY_SLOPE = 0.01          # nn.LeakyReLU default
EPS = 1e-12
_SUBLANE = 16               # bf16 sublane granularity (also fine for f32/int32)
_MXU_DETERM_MAX_NC = 512    # above this, the block-diag Wd is too VMEM hungry


def _round_up(x, m):
    return (x + m - 1) // m * m


# ---------------------------------------------------------------------------
# Kernels
# ---------------------------------------------------------------------------
def _choice_epilogue(util, n_valid, apply_norm, idx_ref):
    """Shared f32 epilogue: optional row norm, padding mask, first-argmax idx."""
    lane = lax.broadcasted_iota(jnp.int32, util.shape, 1)
    valid = lane < n_valid
    if apply_norm:
        # TODO(synk): `norm` is not shown in the source module; row-wise L2 is
        # assumed. A positive per-row scale cannot change the argmax below, so
        # this is gated off by default (only matters once a magnitude-sensitive
        # solver is injected).
        u = jnp.where(valid, util, 0.0)
        util = util * lax.rsqrt(jnp.sum(u * u, axis=-1, keepdims=True) + EPS)
    util = jnp.where(valid, util, -jnp.inf)
    m = jnp.max(util, axis=-1, keepdims=True)
    cand = jnp.where(util == m, lane, jnp.int32(util.shape[-1]))
    # TODO(synk): the real solver is injected at construction; first-argmax
    # (emitted as the chosen index) is the placeholder solver.
    idx_ref[...] = jnp.min(cand, axis=-1, keepdims=True)


def _decoder_kernel_fused(ctx_ref, lat_ref,
                          w0_ref, b0_ref, w1_ref, b1_ref,
                          wout_ref, bout_ref,
                          idx_ref, *, n_valid, apply_norm):
    # Random utility MLP: bf16 MXU matmuls, f32 accumulation, f32 epilogue.
    h = jnp.dot(lat_ref[...], w0_ref[...],
                preferred_element_type=jnp.float32) + b0_ref[...]
    h = jnp.where(h > 0, h, LEAKY_SLOPE * h)
    h = jnp.dot(h.astype(w1_ref.dtype), w1_ref[...],
                preferred_element_type=jnp.float32) + b1_ref[...]
    h = jnp.where(h > 0, h, LEAKY_SLOPE * h)
    # Deterministic utility (beta Linear packed block-diagonally into wout) is
    # fused with the MLP output layer: one K = H1P + KD matmul fills the
    # 256-deep MXU on v6e/v7x instead of two half-depth K=128 pushes.
    hx = jnp.concatenate([h.astype(wout_ref.dtype), ctx_ref[...]], axis=-1)
    util = jnp.dot(hx, wout_ref[...],
                   preferred_element_type=jnp.float32) + bout_ref[...]
    _choice_epilogue(util, n_valid, apply_norm, idx_ref)


def _decoder_kernel_vpu_determ(ctx_ref, lat_ref, beta_ref,
                               w0_ref, b0_ref, w1_ref, b1_ref,
                               w2_ref, bout_ref,
                               idx_ref, *, n_valid, apply_norm):
    h = jnp.dot(lat_ref[...], w0_ref[...],
                preferred_element_type=jnp.float32) + b0_ref[...]
    h = jnp.where(h > 0, h, LEAKY_SLOPE * h)
    h = jnp.dot(h.astype(w1_ref.dtype), w1_ref[...],
                preferred_element_type=jnp.float32) + b1_ref[...]
    h = jnp.where(h > 0, h, LEAKY_SLOPE * h)
    random = jnp.dot(h.astype(w2_ref.dtype), w2_ref[...],
                     preferred_element_type=jnp.float32)                # (TB, NP)
    # Large-N*C guard (v7x 64 MiB VMEM): deterministic utility via VPU
    # broadcast-multiply + lane reduce -- O(N*C) FLOPs/VMEM instead of the
    # O(N^2*C) block-diagonal MXU weight. Kept in f32 (v5e has no bf16 VPU).
    determ = jnp.sum(ctx_ref[...] * beta_ref[...][None, :, :], axis=-1)  # (TB, NP)
    util = random + determ + bout_ref[...]
    _choice_epilogue(util, n_valid, apply_norm, idx_ref)


# ---------------------------------------------------------------------------
# Host-side packing (hoisted out of the per-forward path) and wrapper
# ---------------------------------------------------------------------------
def pack_params(params, n_alt, context_feat, *, matmul_dtype=jnp.bfloat16,
                mxu_determ_max_nc=_MXU_DETERM_MAX_NC):
    """Pack / pad / cast weights once per parameter update."""
    N, C = int(n_alt), int(context_feat)
    f32 = jnp.float32
    mm = matmul_dtype
    L, H0 = params["w0"].shape
    H1 = params["w1"].shape[1]
    LP, H0P, H1P, NP = (_round_up(d, 128) for d in (L, H0, H1, N))

    def pad2(w, r, c):
        return jnp.pad(w.astype(f32), ((0, r - w.shape[0]), (0, c - w.shape[1])))

    packed = {
        "dims": {"N": N, "C": C, "L": L, "LP": LP, "H0P": H0P, "H1P": H1P, "NP": NP},
        "matmul_dtype": mm,
        "w0": pad2(params["w0"], LP, H0P).astype(mm),
        "b0": jnp.pad(params["b0"].reshape(1, H0).astype(f32), ((0, 0), (0, H0P - H0))),
        "w1": pad2(params["w1"], H0P, H1P).astype(mm),
        "b1": jnp.pad(params["b1"].reshape(1, H1).astype(f32), ((0, 0), (0, H1P - H1))),
        # beta's bias is folded into the output bias (no separate (1,1) tile).
        "b_out": (jnp.pad(params["b2"].reshape(1, N).astype(f32), ((0, 0), (0, NP - N)))
                  + params["beta_b"].reshape(1, 1).astype(f32)),
        "fused_determ": N * C <= mxu_determ_max_nc,
    }
    if packed["fused_determ"]:
        KD = _round_up(N * C, 128)
        packed["dims"]["KD"] = KD
        beta_w = params["beta_w"].reshape(C).astype(f32)
        # Wd[(n*C + c), m] = beta_w[c] * (n == m): block-diagonal beta Linear.
        wd_core = jnp.einsum("nm,c->ncm", jnp.eye(N, dtype=f32), beta_w).reshape(N * C, N)
        w_out = jnp.zeros((H1P + KD, NP), f32)
        w_out = w_out.at[:H1, :N].set(params["w2"].astype(f32))
        w_out = w_out.at[H1P:H1P + N * C, :N].set(wd_core)
        packed["w_out"] = w_out.astype(mm)
    else:
        packed["w2"] = pad2(params["w2"], H1P, NP).astype(mm)
        packed["beta_w"] = params["beta_w"].reshape(1, C).astype(f32)
    return packed


def _choose_batch_tiling(batch, max_tile_b):
    """Pad batch only to sublane granularity (not tile_b) and re-balance the
    tile so padding is minimal; force >=2 grid steps when the batch allows it
    so the 'parallel' axis shards across v7x's two TensorCores."""
    bp = _round_up(max(batch, 1), _SUBLANE)
    tb = min(_round_up(max_tile_b, _SUBLANE), bp)
    num = pl.cdiv(bp, tb)
    if num == 1 and bp >= 2 * _SUBLANE:
        num = 2
    tb = _round_up(pl.cdiv(bp, num), _SUBLANE)
    return tb * num, tb, num


def _vmem_limit_bytes():
    """Generation-aware VMEM budget: ~56 MiB on v7x (64 MiB physical), up to
    100 MiB on v5e/v6e (128 MiB physical); 32 MiB floor if the query fails."""
    try:
        cap = int(pltpu.get_tpu_info().vmem_capacity_bytes)
        return int(max(32 << 20, min(cap - (8 << 20), 100 << 20)))
    except Exception:
        return 32 << 20


def solving_decoder(latents, context, packed, *, tile_b=512, apply_norm=False):
    """SolvingDecoder forward with pre-packed weights (see pack_params).

    Returns the placeholder solver's one-hot choices, shape (B, N) float32.
    """
    B, N, C = context.shape
    d = packed["dims"]
    assert (N, C) == (d["N"], d["C"]), "context shape mismatch vs packed params"
    assert latents.shape == (B, d["L"]), "latents shape mismatch vs packed params"
    mm = packed["matmul_dtype"]
    LP, H0P, H1P, NP = d["LP"], d["H0P"], d["H1P"], d["NP"]

    Bp, tb, num_tiles = _choose_batch_tiling(B, tile_b)
    lat = jnp.pad(latents, ((0, Bp - B), (0, LP - d["L"]))).astype(mm)

    if packed["fused_determ"]:
        KD = d["KD"]
        ctx = jnp.pad(context.reshape(B, N * C),
                      ((0, Bp - B), (0, KD - N * C))).astype(mm)
        args = (ctx, lat, packed["w0"], packed["b0"], packed["w1"], packed["b1"],
                packed["w_out"], packed["b_out"])
        row_shapes = [(tb, KD), (tb, LP)]
        res_shapes = [(LP, H0P), (1, H0P), (H0P, H1P), (1, H1P),
                      (H1P + KD, NP), (1, NP)]
        kernel = partial(_decoder_kernel_fused, n_valid=N, apply_norm=apply_norm)
    else:
        # f32 context keeps the determ path on the f32 VPU (v5e friendly).
        ctx = jnp.pad(context.astype(jnp.float32),
                      ((0, Bp - B), (0, NP - N), (0, 0)))
        args = (ctx, lat, packed["beta_w"], packed["w0"], packed["b0"],
                packed["w1"], packed["b1"], packed["w2"], packed["b_out"])
        row_shapes = [(tb, NP, C), (tb, LP)]
        res_shapes = [(1, C), (LP, H0P), (1, H0P), (H0P, H1P), (1, H1P),
                      (H1P, NP), (1, NP)]
        kernel = partial(_decoder_kernel_vpu_determ, n_valid=N, apply_norm=apply_norm)

    def _call(single_buffer_weights):
        def row(shape):      # batch-tiled inputs
            return pl.BlockSpec(shape, lambda i: (i,) + (0,) * (len(shape) - 1))

        def res(shape):      # VMEM-resident weights / biases (constant index)
            if single_buffer_weights:
                # Single-buffer the resident blocks: halves the weight VMEM
                # footprint (matters most on v7x's 64 MiB VMEM).
                return pl.BlockSpec(shape, lambda i: (0,) * len(shape),
                                    pipeline_mode=pl.Buffered(1))
            return pl.BlockSpec(shape, lambda i: (0,) * len(shape))

        return pl.pallas_call(
            kernel,
            out_shape=jax.ShapeDtypeStruct((Bp, 1), jnp.int32),
            grid_spec=pltpu.PrefetchScalarGridSpec(
                num_scalar_prefetch=0,
                grid=(num_tiles,),
                in_specs=[row(s) for s in row_shapes] + [res(s) for s in res_shapes],
                out_specs=pl.BlockSpec((tb, 1), lambda i: (i, 0))),
            compiler_params=pltpu.CompilerParams(
                dimension_semantics=("parallel",),
                vmem_limit_bytes=_vmem_limit_bytes()),
        )(*args)

    try:
        idx = _call(single_buffer_weights=True)
    except Exception:
        # Fallback for JAX builds without BlockSpec pipeline_mode / Buffered(1)
        # support: default double-buffered weights (identical numerics).
        idx = _call(single_buffer_weights=False)

    # Kernel emits only the argmax index (cuts output HBM traffic ~2x vs an
    # f32 one-hot); expand to the placeholder solver's one-hot on the host.
    return jax.nn.one_hot(idx[:B, 0], N, dtype=jnp.float32)


# ---------------------------------------------------------------------------
# Pure-JAX f32 reference and test harness
# ---------------------------------------------------------------------------
def reference_utilities(latents, context, params):
    """Pure f32 JAX mirror of the PyTorch module's utility computation."""
    B, N, C = context.shape
    determ = (context.reshape(B * N, C) @ params["beta_w"].reshape(C, 1)).reshape(B, N)
    determ = determ + params["beta_b"]
    h = latents @ params["w0"] + params["b0"]
    h = jnp.where(h > 0, h, LEAKY_SLOPE * h)
    h = h @ params["w1"] + params["b1"]
    h = jnp.where(h > 0, h, LEAKY_SLOPE * h)
    random = h @ params["w2"] + params["b2"]
    return determ + random


def init_linear(key, fan_in, fan_out):
    # Mirrors nn.Linear default init (uniform +/- 1/sqrt(fan_in)),
    # weight stored pre-transposed as (in, out).
    kw, kb = jax.random.split(key)
    bound = 1.0 / float(fan_in) ** 0.5
    w = jax.random.uniform(kw, (fan_in, fan_out), jnp.float32, -bound, bound)
    b = jax.random.uniform(kb, (fan_out,), jnp.float32, -bound, bound)
    return w, b


def _check_choices(choices, util_ref, tol=1e-2):
    B, N = util_ref.shape
    assert choices.shape == (B, N)
    assert bool(jnp.all(jnp.sum(choices, axis=-1) == 1.0)), "rows must be one-hot"
    idx = jnp.argmax(choices, axis=-1)
    picked = util_ref[jnp.arange(B), idx]
    best = jnp.max(util_ref, axis=-1)
    # bf16 matmul inputs can flip exact/near ties vs the f32 reference, so
    # accept any choice whose f32 utility is within tol of the row max.
    assert bool(jnp.all(best - picked <= tol * (1.0 + jnp.abs(best)))), \
        "Pallas kernel choice disagrees with reference beyond tolerance"


if __name__ == "__main__":
    # Small shapes consistent with the module:
    B = 2            # batch
    N = 16           # alternatives per observation = obs_dim
    C = 8            # context feature dim = context_dim[1]
    LATENT = 32      # latent_dim
    HID = [32, 32]   # hidden_dims

    key = jax.random.PRNGKey(0)
    k_lat, k_ctx, k_beta, k0, k1, k2 = jax.random.split(key, 6)

    latents = jax.random.normal(k_lat, (B, LATENT), jnp.float32)
    context = jax.random.normal(k_ctx, (B, N, C), jnp.float32)

    bw, bb = init_linear(k_beta, C, 1)          # beta: Linear(C -> 1)
    w0, b0 = init_linear(k0, LATENT, HID[0])    # MLP layer 1 (+LeakyReLU)
    w1, b1 = init_linear(k1, HID[0], HID[1])    # MLP layer 2 (+LeakyReLU)
    w2, b2 = init_linear(k2, HID[1], N)         # MLP output layer (obs_dim)

    params = {
        "beta_w": bw.reshape(C), "beta_b": bb.reshape(()),
        "w0": w0, "b0": b0, "w1": w1, "b1": b1, "w2": w2, "b2": b2,
    }

    util_ref = reference_utilities(latents, context, params)

    # Default path: fused-MXU determ, weights packed once and reused per call.
    packed = pack_params(params, N, C)
    choices = jax.block_until_ready(solving_decoder(latents, context, packed))
    _check_choices(choices, util_ref)

    # Large-N*C guard path (VPU determ), exercised here for coverage.
    packed_vpu = pack_params(params, N, C, mxu_determ_max_nc=0)
    choices_vpu = jax.block_until_ready(solving_decoder(latents, context, packed_vpu))
    _check_choices(choices_vpu, util_ref)

    print("KERNEL_OK")
</pallas_src>

<mosaic_0001>
module attributes {stable_mosaic.version = 11 : i64} {
  func.func @_decoder_kernel_fused(%arg0: i32, %arg1: memref<16x128xbf16, #tpu.memory_space<vmem>>, %arg2: memref<16x128xbf16, #tpu.memory_space<vmem>>, %arg3: memref<128x128xbf16, #tpu.memory_space<vmem>>, %arg4: memref<1x128xf32, #tpu.memory_space<vmem>>, %arg5: memref<128x128xbf16, #tpu.memory_space<vmem>>, %arg6: memref<1x128xf32, #tpu.memory_space<vmem>>, %arg7: memref<256x128xbf16, #tpu.memory_space<vmem>>, %arg8: memref<1x128xf32, #tpu.memory_space<vmem>>, %arg9: memref<16x1xi32, #tpu.memory_space<vmem>>) attributes {dimension_semantics = [#tpu.dimension_semantics<parallel>], iteration_bounds = array<i64: 1>, scalar_prefetch = 0 : i64, scratch_operands = 0 : i64, tpu.core_type = #tpu.core_type<tc>, window_params = [{transform_indices = @transform_0, window_bounds = array<i64: 16, 128>}, {transform_indices = @transform_1, window_bounds = array<i64: 16, 128>}, {pipeline_mode = #tpu.pipeline_mode<synchronous>, transform_indices = @transform_2, window_bounds = array<i64: 128, 128>}, {pipeline_mode = #tpu.pipeline_mode<synchronous>, transform_indices = @transform_3, window_bounds = array<i64: 1, 128>}, {pipeline_mode = #tpu.pipeline_mode<synchronous>, transform_indices = @transform_4, window_bounds = array<i64: 128, 128>}, {pipeline_mode = #tpu.pipeline_mode<synchronous>, transform_indices = @transform_5, window_bounds = array<i64: 1, 128>}, {pipeline_mode = #tpu.pipeline_mode<synchronous>, transform_indices = @transform_6, window_bounds = array<i64: 256, 128>}, {pipeline_mode = #tpu.pipeline_mode<synchronous>, transform_indices = @transform_7, window_bounds = array<i64: 1, 128>}, {transform_indices = @transform_8, window_bounds = array<i64: 16, 1>}]} {
    %c0 = arith.constant 0 : index
    %c0_0 = arith.constant 0 : index
    %0 = vector.load %arg2[%c0, %c0_0] : memref<16x128xbf16, #tpu.memory_space<vmem>>, vector<16x128xbf16>
    %c0_1 = arith.constant 0 : index
    %c0_2 = arith.constant 0 : index
    %1 = vector.load %arg3[%c0_1, %c0_2] : memref<128x128xbf16, #tpu.memory_space<vmem>>, vector<128x128xbf16>
    %cst = arith.constant dense<0.000000e+00> : vector<16x128xf32>
    %2 = tpu.matmul %0, %1, %cst {dimension_numbers = #tpu.dot_dimension_numbers<[1], [0], [0], [1], [0, 0, 1, 1], [], []>} : vector<16x128xbf16>, vector<128x128xbf16>, vector<16x128xf32> -> vector<16x128xf32>
    %c0_3 = arith.constant 0 : index
    %c0_4 = arith.constant 0 : index
    %3 = vector.load %arg4[%c0_3, %c0_4] : memref<1x128xf32, #tpu.memory_space<vmem>>, vector<1x128xf32>
    %4 = vector.broadcast %3 : vector<1x128xf32> to vector<16x128xf32>
    %5 = arith.addf %2, %4 : vector<16x128xf32>
    %cst_5 = arith.constant 0.000000e+00 : f32
    %6 = vector.broadcast %cst_5 : f32 to vector<16x128xf32>
    %7 = arith.cmpf ogt, %5, %6 : vector<16x128xf32>
    %cst_6 = arith.constant 0.00999999977 : f32
    %8 = vector.broadcast %cst_6 : f32 to vector<16x128xf32>
    %9 = arith.mulf %8, %5 : vector<16x128xf32>
    %10 = arith.select %7, %5, %9 : vector<16x128xi1>, vector<16x128xf32>
    %11 = arith.truncf %10 : vector<16x128xf32> to vector<16x128xbf16>
    %c0_7 = arith.constant 0 : index
    %c0_8 = arith.constant 0 : index
    %12 = vector.load %arg5[%c0_7, %c0_8] : memref<128x128xbf16, #tpu.memory_space<vmem>>, vector<128x128xbf16>
    %cst_9 = arith.constant dense<0.000000e+00> : vector<16x128xf32>
    %13 = tpu.matmul %11, %12, %cst_9 {dimension_numbers = #tpu.dot_dimension_numbers<[1], [0], [0], [1], [0, 0, 1, 1], [], []>} : vector<16x128xbf16>, vector<128x128xbf16>, vector<16x128xf32> -> vector<16x128xf32>
    %c0_10 = arith.constant 0 : index
    %c0_11 = arith.constant 0 : index
    %14 = vector.load %arg6[%c0_10, %c0_11] : memref<1x128xf32, #tpu.memory_space<vmem>>, vector<1x128xf32>
    %15 = vector.broadcast %14 : vector<1x128xf32> to vector<16x128xf32>
    %16 = arith.addf %13, %15 : vector<16x128xf32>
    %cst_12 = arith.constant 0.000000e+00 : f32
    %17 = vector.broadcast %cst_12 : f32 to vector<16x128xf32>
    %18 = arith.cmpf ogt, %16, %17 : vector<16x128xf32>
    %cst_13 = arith.constant 0.00999999977 : f32
    %19 = vector.broadcast %cst_13 : f32 to vector<16x128xf32>
    %20 = arith.mulf %19, %16 : vector<16x128xf32>
    %21 = arith.select %18, %16, %20 : vector<16x128xi1>, vector<16x128xf32>
    %22 = arith.truncf %21 : vector<16x128xf32> to vector<16x128xbf16>
    %c0_14 = arith.constant 0 : index
    %c0_15 = arith.constant 0 : index
    %23 = vector.load %arg1[%c0_14, %c0_15] : memref<16x128xbf16, #tpu.memory_space<vmem>>, vector<16x128xbf16>
    %24 = tpu.concatenate %22, %23 in 1 : vector<16x128xbf16>, vector<16x128xbf16> -> vector<16x256xbf16>
    %c0_16 = arith.constant 0 : index
    %c0_17 = arith.constant 0 : index
    %25 = vector.load %arg7[%c0_16, %c0_17] : memref<256x128xbf16, #tpu.memory_space<vmem>>, vector<256x128xbf16>
    %cst_18 = arith.constant dense<0.000000e+00> : vector<16x128xf32>
    %26 = tpu.matmul %24, %25, %cst_18 {dimension_numbers = #tpu.dot_dimension_numbers<[1], [0], [0], [1], [0, 0, 1, 1], [], []>} : vector<16x256xbf16>, vector<256x128xbf16>, vector<16x128xf32> -> vector<16x128xf32>
    %c0_19 = arith.constant 0 : index
    %c0_20 = arith.constant 0 : index
    %27 = vector.load %arg8[%c0_19, %c0_20] : memref<1x128xf32, #tpu.memory_space<vmem>>, vector<1x128xf32>
    %28 = vector.broadcast %27 : vector<1x128xf32> to vector<16x128xf32>
    %29 = arith.addf %26, %28 : vector<16x128xf32>
    %30 = tpu.iota {dimensions = array<i32: 1>} : vector<16x128xi32>
    %c16_i32 = arith.constant 16 : i32
    %31 = vector.broadcast %c16_i32 : i32 to vector<16x128xi32>
    %32 = arith.cmpi slt, %30, %31 : vector<16x128xi32>
    %cst_21 = arith.constant 0xFF800000 : f32
    %33 = vector.broadcast %cst_21 : f32 to vector<16x128xf32>
    %34 = arith.select %32, %29, %33 : vector<16x128xi1>, vector<16x128xf32>
    %cst_22 = arith.constant dense<0xFF800000> : vector<16xf32>
    %35 = vector.multi_reduction <maximumf>, %34, %cst_22 [1] : vector<16x128xf32> to vector<16xf32>
    %36 = vector.shape_cast %35 : vector<16xf32> to vector<16x1xf32>
    %37 = vector.broadcast %36 : vector<16x1xf32> to vector<16x128xf32>
    %38 = arith.cmpf oeq, %34, %37 : vector<16x128xf32>
    %c128_i32 = arith.constant 128 : i32
    %39 = vector.broadcast %c128_i32 : i32 to vector<16x128xi32>
    %40 = arith.select %38, %30, %39 : vector<16x128xi1>, vector<16x128xi32>
    %cst_23 = arith.constant dense<2147483647> : vector<16xi32>
    %41 = vector.multi_reduction <minsi>, %40, %cst_23 [1] : vector<16x128xi32> to vector<16xi32>
    %42 = vector.shape_cast %41 : vector<16xi32> to vector<16x1xi32>
    %c0_24 = arith.constant 0 : index
    %c0_25 = arith.constant 0 : index
    %43 = vector.load %arg9[%c0_24, %c0_25] : memref<16x1xi32, #tpu.memory_space<vmem>>, vector<16x1xi32>
    tpu.vector_store %arg9[%c0_24, %c0_25], %42 {strides = array<i32>} : memref<16x1xi32, #tpu.memory_space<vmem>>, vector<16x1xi32>,
    return
  }
  func.func @transform_0(%arg0: i32) -> (i32, i32) {
    %c0_i32 = arith.constant 0 : i32
    %c0_i32_0 = arith.constant 0 : i32
    return %arg0, %c0_i32 : i32, i32
  }
  func.func @transform_1(%arg0: i32) -> (i32, i32) {
    %c0_i32 = arith.constant 0 : i32
    %c0_i32_0 = arith.constant 0 : i32
    return %arg0, %c0_i32 : i32, i32
  }
  func.func @transform_2(%arg0: i32) -> (i32, i32) {
    %c0_i32 = arith.constant 0 : i32
    %c0_i32_0 = arith.constant 0 : i32
    %c0_i32_1 = arith.constant 0 : i32
    return %c0_i32, %c0_i32_0 : i32, i32
  }
  func.func @transform_3(%arg0: i32) -> (i32, i32) {
    %c0_i32 = arith.constant 0 : i32
    %c0_i32_0 = arith.constant 0 : i32
    %c0_i32_1 = arith.constant 0 : i32
    return %c0_i32, %c0_i32_0 : i32, i32
  }
  func.func @transform_4(%arg0: i32) -> (i32, i32) {
    %c0_i32 = arith.constant 0 : i32
    %c0_i32_0 = arith.constant 0 : i32
    %c0_i32_1 = arith.constant 0 : i32
    return %c0_i32, %c0_i32_0 : i32, i32
  }
  func.func @transform_5(%arg0: i32) -> (i32, i32) {
    %c0_i32 = arith.constant 0 : i32
    %c0_i32_0 = arith.constant 0 : i32
    %c0_i32_1 = arith.constant 0 : i32
    return %c0_i32, %c0_i32_0 : i32, i32
  }
  func.func @transform_6(%arg0: i32) -> (i32, i32) {
    %c0_i32 = arith.constant 0 : i32
    %c0_i32_0 = arith.constant 0 : i32
    %c0_i32_1 = arith.constant 0 : i32
    return %c0_i32, %c0_i32_0 : i32, i32
  }
  func.func @transform_7(%arg0: i32) -> (i32, i32) {
    %c0_i32 = arith.constant 0 : i32
    %c0_i32_0 = arith.constant 0 : i32
    %c0_i32_1 = arith.constant 0 : i32
    return %c0_i32, %c0_i32_0 : i32, i32
  }
  func.func @transform_8(%arg0: i32) -> (i32, i32) {
    %c0_i32 = arith.constant 0 : i32
    %c0_i32_0 = arith.constant 0 : i32
    return %arg0, %c0_i32 : i32, i32
  }
}

module attributes {stable_mosaic.version = 11 : i64} {
  func.func @_decoder_kernel_fused(%arg0: i32, %arg1: memref<16x128xbf16, #tpu.memory_space<vmem>>, %arg2: memref<16x128xbf16, #tpu.memory_space<vmem>>, %arg3: memref<128x128xbf16, #tpu.memory_space<vmem>>, %arg4: memref<1x128xf32, #tpu.memory_space<vmem>>, %arg5: memref<128x128xbf16, #tpu.memory_space<vmem>>, %arg6: memref<1x128xf32, #tpu.memory_space<vmem>>, %arg7: memref<256x128xbf16, #tpu.memory_space<vmem>>, %arg8: memref<1x128xf32, #tpu.memory_space<vmem>>, %arg9: memref<16x1xi32, #tpu.memory_space<vmem>>) attributes {dimension_semantics = [#tpu.dimension_semantics<parallel>], iteration_bounds = array<i64: 1>, scalar_prefetch = 0 : i64, scratch_operands = 0 : i64, tpu.core_type = #tpu.core_type<tc>, window_params = [{transform_indices = @transform_0, window_bounds = array<i64: 16, 128>}, {transform_indices = @transform_1, window_bounds = array<i64: 16, 128>}, {pipeline_mode = #tpu.pipeline_mode<synchronous>, transform_indices = @transform_2, window_bounds = array<i64: 128, 128>}, {pipeline_mode = #tpu.pipeline_mode<synchronous>, transform_indices = @transform_3, window_bounds = array<i64: 1, 128>}, {pipeline_mode = #tpu.pipeline_mode<synchronous>, transform_indices = @transform_4, window_bounds = array<i64: 128, 128>}, {pipeline_mode = #tpu.pipeline_mode<synchronous>, transform_indices = @transform_5, window_bounds = array<i64: 1, 128>}, {pipeline_mode = #tpu.pipeline_mode<synchronous>, transform_indices = @transform_6, window_bounds = array<i64: 256, 128>}, {pipeline_mode = #tpu.pipeline_mode<synchronous>, transform_indices = @transform_7, window_bounds = array<i64: 1, 128>}, {transform_indices = @transform_8, window_bounds = array<i64: 16, 1>}]} {
    %c0 = arith.constant 0 : index
    %c0_0 = arith.constant 0 : index
    %0 = vector.load %arg2[%c0, %c0_0] : memref<16x128xbf16, #tpu.memory_space<vmem>>, vector<16x128xbf16>
    %c0_1 = arith.constant 0 : index
    %c0_2 = arith.constant 0 : index
    %1 = vector.load %arg3[%c0_1, %c0_2] : memref<128x128xbf16, #tpu.memory_space<vmem>>, vector<128x128xbf16>
    %cst = arith.constant dense<0.000000e+00> : vector<16x128xf32>
    %2 = tpu.matmul %0, %1, %cst {dimension_numbers = #tpu.dot_dimension_numbers<[1], [0], [0], [1], [0, 0, 1, 1], [], []>} : vector<16x128xbf16>, vector<128x128xbf16>, vector<16x128xf32> -> vector<16x128xf32>
    %c0_3 = arith.constant 0 : index
    %c0_4 = arith.constant 0 : index
    %3 = vector.load %arg4[%c0_3, %c0_4] : memref<1x128xf32, #tpu.memory_space<vmem>>, vector<1x128xf32>
    %4 = vector.broadcast %3 : vector<1x128xf32> to vector<16x128xf32>
    %5 = arith.addf %2, %4 : vector<16x128xf32>
    %cst_5 = arith.constant 0.000000e+00 : f32
    %6 = vector.broadcast %cst_5 : f32 to vector<16x128xf32>
    %7 = arith.cmpf ogt, %5, %6 : vector<16x128xf32>
    %cst_6 = arith.constant 0.00999999977 : f32
    %8 = vector.broadcast %cst_6 : f32 to vector<16x128xf32>
    %9 = arith.mulf %8, %5 : vector<16x128xf32>
    %10 = arith.select %7, %5, %9 : vector<16x128xi1>, vector<16x128xf32>
    %11 = arith.truncf %10 : vector<16x128xf32> to vector<16x128xbf16>
    %c0_7 = arith.constant 0 : index
    %c0_8 = arith.constant 0 : index
    %12 = vector.load %arg5[%c0_7, %c0_8] : memref<128x128xbf16, #tpu.memory_space<vmem>>, vector<128x128xbf16>
    %cst_9 = arith.constant dense<0.000000e+00> : vector<16x128xf32>
    %13 = tpu.matmul %11, %12, %cst_9 {dimension_numbers = #tpu.dot_dimension_numbers<[1], [0], [0], [1], [0, 0, 1, 1], [], []>} : vector<16x128xbf16>, vector<128x128xbf16>, vector<16x128xf32> -> vector<16x128xf32>
    %c0_10 = arith.constant 0 : index
    %c0_11 = arith.constant 0 : index
    %14 = vector.load %arg6[%c0_10, %c0_11] : memref<1x128xf32, #tpu.memory_space<vmem>>, vector<1x128xf32>
    %15 = vector.broadcast %14 : vector<1x128xf32> to vector<16x128xf32>
    %16 = arith.addf %13, %15 : vector<16x128xf32>
    %cst_12 = arith.constant 0.000000e+00 : f32
    %17 = vector.broadcast %cst_12 : f32 to vector<16x128xf32>
    %18 = arith.cmpf ogt, %16, %17 : vector<16x128xf32>
    %cst_13 = arith.constant 0.00999999977 : f32
    %19 = vector.broadcast %cst_13 : f32 to vector<16x128xf32>
    %20 = arith.mulf %19, %16 : vector<16x128xf32>
    %21 = arith.select %18, %16, %20 : vector<16x128xi1>, vector<16x128xf32>
    %22 = arith.truncf %21 : vector<16x128xf32> to vector<16x128xbf16>
    %c0_14 = arith.constant 0 : index
    %c0_15 = arith.constant 0 : index
    %23 = vector.load %arg1[%c0_14, %c0_15] : memref<16x128xbf16, #tpu.memory_space<vmem>>, vector<16x128xbf16>
    %24 = tpu.concatenate %22, %23 in 1 : vector<16x128xbf16>, vector<16x128xbf16> -> vector<16x256xbf16>
    %c0_16 = arith.constant 0 : index
    %c0_17 = arith.constant 0 : index
    %25 = vector.load %arg7[%c0_16, %c0_17] : memref<256x128xbf16, #tpu.memory_space<vmem>>, vector<256x128xbf16>
    %cst_18 = arith.constant dense<0.000000e+00> : vector<16x128xf32>
    %26 = tpu.matmul %24, %25, %cst_18 {dimension_numbers = #tpu.dot_dimension_numbers<[1], [0], [0], [1], [0, 0, 1, 1], [], []>} : vector<16x256xbf16>, vector<256x128xbf16>, vector<16x128xf32> -> vector<16x128xf32>
    %c0_19 = arith.constant 0 : index
    %c0_20 = arith.constant 0 : index
    %27 = vector.load %arg8[%c0_19, %c0_20] : memref<1x128xf32, #tpu.memory_space<vmem>>, vector<1x128xf32>
    %28 = vector.broadcast %27 : vector<1x128xf32> to vector<16x128xf32>
    %29 = arith.addf %26, %28 : vector<16x128xf32>
    %30 = tpu.iota {dimensions = array<i32: 1>} : vector<16x128xi32>
    %c16_i32 = arith.constant 16 : i32
    %31 = vector.broadcast %c16_i32 : i32 to vector<16x128xi32>
    %32 = arith.cmpi slt, %30, %31 : vector<16x128xi32>
    %cst_21 = arith.constant 0xFF800000 : f32
    %33 = vector.broadcast %cst_21 : f32 to vector<16x128xf32>
    %34 = arith.select %32, %29, %33 : vector<16x128xi1>, vector<16x128xf32>
    %cst_22 = arith.constant dense<0xFF800000> : vector<16xf32>
    %35 = vector.multi_reduction <maximumf>, %34, %cst_22 [1] : vector<16x128xf32> to vector<16xf32>
    %36 = vector.shape_cast %35 : vector<16xf32> to vector<16x1xf32>
    %37 = vector.broadcast %36 : vector<16x1xf32> to vector<16x128xf32>
    %38 = arith.cmpf oeq, %34, %37 : vector<16x128xf32>
    %c128_i32 = arith.constant 128 : i32
    %39 = vector.broadcast %c128_i32 : i32 to vector<16x128xi32>
    %40 = arith.select %38, %30, %39 : vector<16x128xi1>, vector<16x128xi32>
    %cst_23 = arith.constant dense<2147483647> : vector<16xi32>
    %41 = vector.multi_reduction <minsi>, %40, %cst_23 [1] : vector<16x128xi32> to vector<16xi32>
    %42 = vector.shape_cast %41 : vector<16xi32> to vector<16x1xi32>
    %c0_24 = arith.constant 0 : index
    %c0_25 = arith.constant 0 : index
    %43 = vector.load %arg9[%c0_24, %c0_25] : memref<16x1xi32, #tpu.memory_space<vmem>>, vector<16x1xi32>
    tpu.vector_store %arg9[%c0_24, %c0_25], %42 {strides = array<i32>} : memref<16x1xi32, #tpu.memory_space<vmem>>, vector<16x1xi32>,
    return
  }
  func.func @transform_0(%arg0: i32) -> (i32, i32) {
    %c0_i32 = arith.constant 0 : i32
    %c0_i32_0 = arith.constant 0 : i32
    return %arg0, %c0_i32 : i32, i32
  }
  func.func @transform_1(%arg0: i32) -> (i32, i32) {
    %c0_i32 = arith.constant 0 : i32
    %c0_i32_0 = arith.constant 0 : i32
    return %arg0, %c0_i32 : i32, i32
  }
  func.func @transform_2(%arg0: i32) -> (i32, i32) {
    %c0_i32 = arith.constant 0 : i32
    %c0_i32_0 = arith.constant 0 : i32
    %c0_i32_1 = arith.constant 0 : i32
    return %c0_i32, %c0_i32_0 : i32, i32
  }
  func.func @transform_3(%arg0: i32) -> (i32, i32) {
    %c0_i32 = arith.constant 0 : i32
    %c0_i32_0 = arith.constant 0 : i32
    %c0_i32_1 = arith.constant 0 : i32
    return %c0_i32, %c0_i32_0 : i32, i32
  }
  func.func @transform_4(%arg0: i32) -> (i32, i32) {
    %c0_i32 = arith.constant 0 : i32
    %c0_i32_0 = arith.constant 0 : i32
    %c0_i32_1 = arith.constant 0 : i32
    return %c0_i32, %c0_i32_0 : i32, i32
  }
  func.func @transform_5(%arg0: i32) -> (i32, i32) {
    %c0_i32 = arith.constant 0 : i32
    %c0_i32_0 = arith.constant 0 : i32
    %c0_i32_1 = arith.constant 0 : i32
    return %c0_i32, %c0_i32_0 : i32, i32
  }
  func.func @transform_6(%arg0: i32) -> (i32, i32) {
    %c0_i32 = arith.constant 0 : i32
    %c0_i32_0 = arith.constant 0 : i32
    %c0_i32_1 = arith.constant 0 : i32
    return %c0_i32, %c0_i32_0 : i32, i32
  }
  func.func @transform_7(%arg0: i32) -> (i32, i32) {
    %c0_i32 = arith.constant 0 : i32
    %c0_i32_0 = arith.constant 0 : i32
    %c0_i32_1 = arith.constant 0 : i32
    return %c0_i32, %c0_i32_0 : i32, i32
  }
  func.func @transform_8(%arg0: i32) -> (i32, i32) {
    %c0_i32 = arith.constant 0 : i32
    %c0_i32_0 = arith.constant 0 : i32
    return %arg0, %c0_i32 : i32, i32
  }
}

</mosaic_0001>

<llo_original>
// kernel: tpu_custom_call.1
$region0: #{tpu_custom_call.1}
  #allocation0 [shape = 'u32[]', space=smem, size = 0x4, offset = 0x4, fixed_abs, tag = 'smem constant byte address 0x4 - core index']
  #allocation1 [shape = 'u32[72,128]{1,0:T(1,128)}', space=vmem, size = 0x9000, scoped, tag = 'internal scratch']
  %s0 = inlined_call_operand.hbm [shape: bf16[16,128], index: 0, kind: input, shape index: {}]
  %s1 = inlined_call_operand.hbm [shape: bf16[16,128], index: 1, kind: input, shape index: {}]
  %s2 = inlined_call_operand.hbm [shape: bf16[128,128], index: 2, kind: input, shape index: {}]
  %s3 = inlined_call_operand.vmem [shape: f32[1,128], index: 3, kind: input, shape index: {}]
  %s4 = inlined_call_operand.hbm [shape: bf16[128,128], index: 4, kind: input, shape index: {}]
  %s5 = inlined_call_operand.vmem [shape: f32[1,128], index: 5, kind: input, shape index: {}]
  %s6 = inlined_call_operand.hbm [shape: bf16[256,128], index: 6, kind: input, shape index: {}]
  %s7 = inlined_call_operand.vmem [shape: f32[1,128], index: 7, kind: input, shape index: {}]
  %s8 = inlined_call_operand.vmem [shape: s32[16,1], index: 8, kind: output, shape index: {}]
  %s9 = sld [smem:[#allocation0]]
  $region62: #{tpu_custom_call.1} parent=0
    _
  %s11 = ssub.s32 1, %s9
  %s12 = scalar_select 0, %s11, %s9
  $region1: #{tpu_custom_call.1} parent=0
    #allocation2 [shape = 'u8[4096]{0}', space=vmem, size = 0x1000, scoped, tag = 'input window, operand 0, single buffered']
    #allocation3 [shape = 's32[1]{0}', space=sflag, size = 0x4, scoped, tag = 'scoped memory for tpu_custom_call.1']
    #allocation4 [shape = 'u8[4096]{0}', space=vmem, size = 0x1000, scoped, tag = 'input window, operand 1, single buffered']
    #allocation5 [shape = 's32[1]{0}', space=sflag, size = 0x4, scoped, tag = 'scoped memory for tpu_custom_call.1']
    #allocation6 [shape = 'u8[32768]{0}', space=vmem, size = 0x8000, scoped, tag = 'input window, operand 2, single buffered']
    #allocation7 [shape = 'u8[32768]{0}', space=vmem, size = 0x8000, scoped, tag = 'input window, operand 4, single buffered']
    #allocation8 [shape = 's32[1]{0}', space=sflag, size = 0x4, scoped, tag = 'scoped memory for tpu_custom_call.1']
    #allocation9 [shape = 'u8[65536]{0}', space=vmem, size = 0x10000, scoped, tag = 'input window, operand 6, single buffered']
    %13 = vsyncpa [#allocation3], 0
    %14 = vsyncpa [#allocation5], 0
    %15 = vsyncpa [#allocation8], 0
    // Predicated region
    $region2: #{tpu_custom_call.1} parent=1 // pred_check
      _
    $region3: #{tpu_custom_call.1} parent=1 // pred_check_branch
      %17 = sbr.rel (0) target = $region5
    $region4: #{tpu_custom_call.1} parent=1 // pred_region
      %19 = vsyncadd [#allocation3], 0
      %s20 = sshll.u32 %s0, 4
      %s21 = int_to_ptr.hbm [resolvable:$true] %s20
      %s22 = sshll.u32 [#allocation2], 4
      %s23 = int_to_ptr.vmem [resolvable:$true] %s22
      %28 = dma.hbm_to_vmem [thread:$0]  %s21, 128, %s23, [#allocation3], 64, 64, 4
    $region5: #{tpu_custom_call.1} parent=1 // pred_fallthru
      _
    // Predicated region
    $region6: #{tpu_custom_call.1} parent=1 // pred_check
      _
    $region7: #{tpu_custom_call.1} parent=1 // pred_check_branch
      %30 = sbr.rel (0) target = $region9
    $region8: #{tpu_custom_call.1} parent=1 // pred_region
      %32 = vsyncadd [#allocation5], 0
      %s33 = sshll.u32 %s1, 4
      %s34 = int_to_ptr.hbm [resolvable:$true] %s33
      %s35 = sshll.u32 [#allocation4], 4
      %s36 = int_to_ptr.vmem [resolvable:$true] %s35
      %41 = dma.hbm_to_vmem [thread:$0]  %s34, 128, %s36, [#allocation5], 64, 64, 4
    $region9: #{tpu_custom_call.1} parent=1 // pred_fallthru
      _
    // Predicated region
    $region10: #{tpu_custom_call.1} parent=1 // pred_check
      _
    $region11: #{tpu_custom_call.1} parent=1 // pred_check_branch
      %43 = sbr.rel (0) target = $region13
    $region12: #{tpu_custom_call.1} parent=1 // pred_region
      %45 = vsyncadd [#allocation5], 0
      %s46 = sshll.u32 %s2, 4
      %s47 = int_to_ptr.hbm [resolvable:$true] %s46
      %s48 = sshll.u32 [#allocation6], 4
      %s49 = int_to_ptr.vmem [resolvable:$true] %s48
      %54 = dma.hbm_to_vmem [thread:$0]  %s47, 1024, %s49, [#allocation5], 64, 64, 4
    $region13: #{tpu_custom_call.1} parent=1 // pred_fallthru
      _
    // Predicated region
    $region14: #{tpu_custom_call.1} parent=1 // pred_check
      _
    $region15: #{tpu_custom_call.1} parent=1 // pred_check_branch
      %56 = sbr.rel (0) target = $region17
    $region16: #{tpu_custom_call.1} parent=1 // pred_region
      _
    $region17: #{tpu_custom_call.1} parent=1 // pred_fallthru
      _
    // Predicated region
    $region18: #{tpu_custom_call.1} parent=1 // pred_check
      _
    $region19: #{tpu_custom_call.1} parent=1 // pred_check_branch
      %58 = sbr.rel (0) target = $region21
    $region20: #{tpu_custom_call.1} parent=1 // pred_region
      %60 = vsyncadd [#allocation8], 0
      %s61 = sshll.u32 %s4, 4
      %s62 = int_to_ptr.hbm [resolvable:$true] %s61
      %s63 = sshll.u32 [#allocation7], 4
      %s64 = int_to_ptr.vmem [resolvable:$true] %s63
      %69 = dma.hbm_to_vmem [thread:$0]  %s62, 1024, %s64, [#allocation8], 64, 64, 4
    $region21: #{tpu_custom_call.1} parent=1 // pred_fallthru
      _
    // Predicated region
    $region22: #{tpu_custom_call.1} parent=1 // pred_check
      _
    $region23: #{tpu_custom_call.1} parent=1 // pred_check_branch
      %71 = sbr.rel (0) target = $region25
    $region24: #{tpu_custom_call.1} parent=1 // pred_region
      _
    $region25: #{tpu_custom_call.1} parent=1 // pred_fallthru
      _
    // Predicated region
    $region26: #{tpu_custom_call.1} parent=1 // pred_check
      _
    $region27: #{tpu_custom_call.1} parent=1 // pred_check_branch
      %73 = sbr.rel (0) target = $region29
    $region28: #{tpu_custom_call.1} parent=1 // pred_region
      %75 = vsyncadd [#allocation8], 0
      %s76 = sshll.u32 %s6, 4
      %s77 = int_to_ptr.hbm [resolvable:$true] %s76
      %s78 = sshll.u32 [#allocation9], 4
      %s79 = int_to_ptr.vmem [resolvable:$true] %s78
      %84 = dma.hbm_to_vmem [thread:$0]  %s77, 2048, %s79, [#allocation8], 64, 64, 4
    $region29: #{tpu_custom_call.1} parent=1 // pred_fallthru
      _
    // Predicated region
    $region30: #{tpu_custom_call.1} parent=1 // pred_check
      _
    $region31: #{tpu_custom_call.1} parent=1 // pred_check_branch
      %86 = sbr.rel (0) target = $region33
    $region32: #{tpu_custom_call.1} parent=1 // pred_region
      _
    $region33: #{tpu_custom_call.1} parent=1 // pred_fallthru
      _
    // Predicated region
    $region34: #{tpu_custom_call.1} parent=1 // pred_check
      _
    $region35: #{tpu_custom_call.1} parent=1 // pred_check_branch
      %88 = sbr.rel (0) target = $region37
    $region36: #{tpu_custom_call.1} parent=1 // pred_region
      %90 = dma.done [#allocation3], 128
    $region37: #{tpu_custom_call.1} parent=1 // pred_fallthru
      _
    // Predicated region
    $region38: #{tpu_custom_call.1} parent=1 // pred_check
      _
    $region39: #{tpu_custom_call.1} parent=1 // pred_check_branch
      %92 = sbr.rel (0) target = $region41
    $region40: #{tpu_custom_call.1} parent=1 // pred_region
      %94 = dma.done [#allocation5], 128
    $region41: #{tpu_custom_call.1} parent=1 // pred_fallthru
      _
    // Predicated region
    $region42: #{tpu_custom_call.1} parent=1 // pred_check
      _
    $region43: #{tpu_custom_call.1} parent=1 // pred_check_branch
      %96 = sbr.rel (0) target = $region45
    $region44: #{tpu_custom_call.1} parent=1 // pred_region
      %98 = dma.done [#allocation5], 1024
    $region45: #{tpu_custom_call.1} parent=1 // pred_fallthru
      _
    // Predicated region
    $region46: #{tpu_custom_call.1} parent=1 // pred_check
      _
    $region47: #{tpu_custom_call.1} parent=1 // pred_check_branch
      %100 = sbr.rel (0) target = $region49
    $region48: #{tpu_custom_call.1} parent=1 // pred_region
      %102 = dma.done [#allocation8], 1024
    $region49: #{tpu_custom_call.1} parent=1 // pred_fallthru
      _
    // Predicated region
    $region50: #{tpu_custom_call.1} parent=1 // pred_check
      _
    $region51: #{tpu_custom_call.1} parent=1 // pred_check_branch
      %104 = sbr.rel (0) target = $region53
    $region52: #{tpu_custom_call.1} parent=1 // pred_region
      %106 = dma.done [#allocation8], 2048
    $region53: #{tpu_custom_call.1} parent=1 // pred_fallthru
      _
    %v107 = vld [vmem:[#allocation4] sm:$0xf]
    %v108 = vld [vmem:[#allocation4 + $0x4] sm:$0xf]
    %v109 = vld [vmem:[#allocation6] sm:$0xf]
    %v110 = vld [vmem:[#allocation6 + $0x4] sm:$0xf]
    %v111 = vld [vmem:[#allocation6 + $0x8] sm:$0xf]
    %v112 = vld [vmem:[#allocation6 + $0xc] sm:$0xf]
    %v113 = vld [vmem:[#allocation6 + $0x10] sm:$0xf]
    %v114 = vld [vmem:[#allocation6 + $0x14] sm:$0xf]
    %v115 = vld [vmem:[#allocation6 + $0x18] sm:$0xf]
    %v116 = vld [vmem:[#allocation6 + $0x1c] sm:$0xf]
    %v117 = vld [vmem:[#allocation6 + $0x20] sm:$0xf]
    %v118 = vld [vmem:[#allocation6 + $0x24] sm:$0xf]
    %v119 = vld [vmem:[#allocation6 + $0x28] sm:$0xf]
    %v120 = vld [vmem:[#allocation6 + $0x2c] sm:$0xf]
    %v121 = vld [vmem:[#allocation6 + $0x30] sm:$0xf]
    %v122 = vld [vmem:[#allocation6 + $0x34] sm:$0xf]
    %v123 = vld [vmem:[#allocation6 + $0x38] sm:$0xf]
    %v124 = vld [vmem:[#allocation6 + $0x3c] sm:$0xf]
    %v125 = vld [vmem:[%s3] sm:$0x1]
    %v127 = vperm.slane %v125, 0
    %v131 = vunpack.c.l.b16 %v107
    %v132 = vunpack.c.l.b16 %v108
    %v133 = vpack.c.b16 %v132, %v131
    %v151 = vunpack.c.l.b16 %v109
    %v152 = vunpack.c.l.b16 %v110
    %v153 = vunpack.c.l.b16 %v111
    %v154 = vunpack.c.l.b16 %v112
    %v155 = vunpack.c.l.b16 %v113
    %v156 = vunpack.c.l.b16 %v114
    %v157 = vunpack.c.l.b16 %v115
    %v158 = vunpack.c.l.b16 %v116
    %v159 = vunpack.c.l.b16 %v117
    %v160 = vunpack.c.l.b16 %v118
    %v161 = vunpack.c.l.b16 %v119
    %v162 = vunpack.c.l.b16 %v120
    %v163 = vunpack.c.l.b16 %v121
    %v164 = vunpack.c.l.b16 %v122
    %v165 = vunpack.c.l.b16 %v123
    %v166 = vunpack.c.l.b16 %v124
    %v167 = vpack.c.b16 %v152, %v151
    %v168 = vpack.c.b16 %v154, %v153
    %v169 = vpack.c.b16 %v156, %v155
    %v170 = vpack.c.b16 %v158, %v157
    %v171 = vpack.c.b16 %v160, %v159
    %v172 = vpack.c.b16 %v162, %v161
    %v173 = vpack.c.b16 %v164, %v163
    %v174 = vpack.c.b16 %v166, %v165
    %183 = vmatpush.bf16.msra.mxu0 %v174
    %184 = vmatpush.bf16.msra.mxu0 %v173
    %185 = vmatpush.bf16.msra.mxu0 %v172
    %186 = vmatpush.bf16.msra.mxu0 %v171
    %187 = vmatpush.bf16.msra.mxu0 %v170
    %188 = vmatpush.bf16.msra.mxu0 %v169
    %189 = vmatpush.bf16.msra.mxu0 %v168
    %190 = vmatpush.bf16.msra.mxu0 %v167
    %191 = vmatmul.bf16.gmra.mxu0 %v133
    %v192 = vpop.f32.mrf.mxu0
    %v193 = vadd.f32 %v127, %v192
    %v194 = vpop.f32.mrf.mxu0
    %v195 = vadd.f32 %v127, %v194
    %196 = vdwg.mxu0
    %vm197 = vcmp.gt.f32.partialorder %v193, 0.0
    %vm198 = vcmp.gt.f32.partialorder %v195, 0.0
    %v199 = vmul.f32 %v193, 0.01
    %v200 = vmul.f32 %v195, 0.01
    %v201 = vsel %vm197, %v193, %v199
    %v202 = vsel %vm198, %v195, %v200
    %v203 = vpack.c.bf16 %v202, %v201
    %v204 = vld [vmem:[#allocation7] sm:$0xf]
    %v205 = vld [vmem:[#allocation7 + $0x4] sm:$0xf]
    %v206 = vld [vmem:[#allocation7 + $0x8] sm:$0xf]
    %v207 = vld [vmem:[#allocation7 + $0xc] sm:$0xf]
    %v208 = vld [vmem:[#allocation7 + $0x10] sm:$0xf]
    %v209 = vld [vmem:[#allocation7 + $0x14] sm:$0xf]
    %v210 = vld [vmem:[#allocation7 + $0x18] sm:$0xf]
    %v211 = vld [vmem:[#allocation7 + $0x1c] sm:$0xf]
    %v212 = vld [vmem:[#allocation7 + $0x20] sm:$0xf]
    %v213 = vld [vmem:[#allocation7 + $0x24] sm:$0xf]
    %v214 = vld [vmem:[#allocation7 + $0x28] sm:$0xf]
    %v215 = vld [vmem:[#allocation7 + $0x2c] sm:$0xf]
    %v216 = vld [vmem:[#allocation7 + $0x30] sm:$0xf]
    %v217 = vld [vmem:[#allocation7 + $0x34] sm:$0xf]
    %v218 = vld [vmem:[#allocation7 + $0x38] sm:$0xf]
    %v219 = vld [vmem:[#allocation7 + $0x3c] sm:$0xf]
    %v220 = vld [vmem:[%s5] sm:$0x1]
    %v222 = vperm.slane %v220, 0
    %v240 = vunpack.c.l.b16 %v204
    %v241 = vunpack.c.l.b16 %v205
    %v242 = vunpack.c.l.b16 %v206
    %v243 = vunpack.c.l.b16 %v207
    %v244 = vunpack.c.l.b16 %v208
    %v245 = vunpack.c.l.b16 %v209
    %v246 = vunpack.c.l.b16 %v210
    %v247 = vunpack.c.l.b16 %v211
    %v248 = vunpack.c.l.b16 %v212
    %v249 = vunpack.c.l.b16 %v213
    %v250 = vunpack.c.l.b16 %v214
    %v251 = vunpack.c.l.b16 %v215
    %v252 = vunpack.c.l.b16 %v216
    %v253 = vunpack.c.l.b16 %v217
    %v254 = vunpack.c.l.b16 %v218
    %v255 = vunpack.c.l.b16 %v219
    %v256 = vpack.c.b16 %v241, %v240
    %v257 = vpack.c.b16 %v243, %v242
    %v258 = vpack.c.b16 %v245, %v244
    %v259 = vpack.c.b16 %v247, %v246
    %v260 = vpack.c.b16 %v249, %v248
    %v261 = vpack.c.b16 %v251, %v250
    %v262 = vpack.c.b16 %v253, %v252
    %v263 = vpack.c.b16 %v255, %v254
    %272 = vmatpush.bf16.msra.mxu0 %v263
    %273 = vmatpush.bf16.msra.mxu0 %v262
    %274 = vmatpush.bf16.msra.mxu0 %v261
    %275 = vmatpush.bf16.msra.mxu0 %v260
    %276 = vmatpush.bf16.msra.mxu0 %v259
    %277 = vmatpush.bf16.msra.mxu0 %v258
    %278 = vmatpush.bf16.msra.mxu0 %v257
    %279 = vmatpush.bf16.msra.mxu0 %v256
    %280 = vmatmul.bf16.gmra.mxu0 %v203
    %v281 = vpop.f32.mrf.mxu0
    %v282 = vadd.f32 %v222, %v281
    %v283 = vpop.f32.mrf.mxu0
    %v284 = vadd.f32 %v222, %v283
    %285 = vdwg.mxu0
    %vm286 = vcmp.gt.f32.partialorder %v282, 0.0
    %vm287 = vcmp.gt.f32.partialorder %v284, 0.0
    %v288 = vmul.f32 %v282, 0.01
    %v289 = vmul.f32 %v284, 0.01
    %v290 = vsel %vm286, %v282, %v288
    %v291 = vsel %vm287, %v284, %v289
    %v292 = vpack.c.bf16 %v290, %v290
    %v293 = vpack.c.bf16 %v291, %v291
    %v294 = vld [vmem:[#allocation2] sm:$0xf]
    %v295 = vld [vmem:[#allocation2 + $0x4] sm:$0xf]
    %v298 = vunpack.c.l.b16 %v292
    %v299 = vunpack.c.l.b16 %v293
    %v300 = vpack.c.b16 %v299, %v298
    %v304 = vunpack.c.l.b16 %v294
    %v305 = vunpack.c.l.b16 %v295
    %v306 = vpack.c.b16 %v305, %v304
    %v308 = vld [vmem:[#allocation9] sm:$0xf]
    %v309 = vld [vmem:[#allocation9 + $0x4] sm:$0xf]
    %v310 = vld [vmem:[#allocation9 + $0x8] sm:$0xf]
    %v311 = vld [vmem:[#allocation9 + $0xc] sm:$0xf]
    %v312 = vld [vmem:[#allocation9 + $0x10] sm:$0xf]
    %v313 = vld [vmem:[#allocation9 + $0x14] sm:$0xf]
    %v314 = vld [vmem:[#allocation9 + $0x18] sm:$0xf]
    %v315 = vld [vmem:[#allocation9 + $0x1c] sm:$0xf]
    %v316 = vld [vmem:[#allocation9 + $0x20] sm:$0xf]
    %v317 = vld [vmem:[#allocation9 + $0x24] sm:$0xf]
    %v318 = vld [vmem:[#allocation9 + $0x28] sm:$0xf]
    %v319 = vld [vmem:[#allocation9 + $0x2c] sm:$0xf]
    %v320 = vld [vmem:[#allocation9 + $0x30] sm:$0xf]
    %v321 = vld [vmem:[#allocation9 + $0x34] sm:$0xf]
    %v322 = vld [vmem:[#allocation9 + $0x38] sm:$0xf]
    %v323 = vld [vmem:[#allocation9 + $0x3c] sm:$0xf]
    %v324 = vld [vmem:[#allocation9 + $0x40] sm:$0xf]
    %v325 = vld [vmem:[#allocation9 + $0x44] sm:$0xf]
    %v326 = vld [vmem:[#allocation9 + $0x48] sm:$0xf]
    %v327 = vld [vmem:[#allocation9 + $0x4c] sm:$0xf]
    %v328 = vld [vmem:[#allocation9 + $0x50] sm:$0xf]
    %v329 = vld [vmem:[#allocation9 + $0x54] sm:$0xf]
    %v330 = vld [vmem:[#allocation9 + $0x58] sm:$0xf]
    %v331 = vld [vmem:[#allocation9 + $0x5c] sm:$0xf]
    %v332 = vld [vmem:[#allocation9 + $0x60] sm:$0xf]
    %v333 = vld [vmem:[#allocation9 + $0x64] sm:$0xf]
    %v334 = vld [vmem:[#allocation9 + $0x68] sm:$0xf]
    %v335 = vld [vmem:[#allocation9 + $0x6c] sm:$0xf]
    %v336 = vld [vmem:[#allocation9 + $0x70] sm:$0xf]
    %v337 = vld [vmem:[#allocation9 + $0x74] sm:$0xf]
    %v338 = vld [vmem:[#allocation9 + $0x78] sm:$0xf]
    %v339 = vld [vmem:[#allocation9 + $0x7c] sm:$0xf]
    %v340 = vld [vmem:[%s7] sm:$0x1]
    %v342 = vperm.slane %v340, 0
    %v376 = vunpack.c.l.b16 %v308
    %v377 = vunpack.c.l.b16 %v309
    %v378 = vunpack.c.l.b16 %v310
    %v379 = vunpack.c.l.b16 %v311
    %v380 = vunpack.c.l.b16 %v312
    %v381 = vunpack.c.l.b16 %v313
    %v382 = vunpack.c.l.b16 %v314
    %v383 = vunpack.c.l.b16 %v315
    %v384 = vunpack.c.l.b16 %v316
    %v385 = vunpack.c.l.b16 %v317
    %v386 = vunpack.c.l.b16 %v318
    %v387 = vunpack.c.l.b16 %v319
    %v388 = vunpack.c.l.b16 %v320
    %v389 = vunpack.c.l.b16 %v321
    %v390 = vunpack.c.l.b16 %v322
    %v391 = vunpack.c.l.b16 %v323
    %v392 = vunpack.c.l.b16 %v324
    %v393 = vunpack.c.l.b16 %v325
    %v394 = vunpack.c.l.b16 %v326
    %v395 = vunpack.c.l.b16 %v327
    %v396 = vunpack.c.l.b16 %v328
    %v397 = vunpack.c.l.b16 %v329
    %v398 = vunpack.c.l.b16 %v330
    %v399 = vunpack.c.l.b16 %v331
    %v400 = vunpack.c.l.b16 %v332
    %v401 = vunpack.c.l.b16 %v333
    %v402 = vunpack.c.l.b16 %v334
    %v403 = vunpack.c.l.b16 %v335
    %v404 = vunpack.c.l.b16 %v336
    %v405 = vunpack.c.l.b16 %v337
    %v406 = vunpack.c.l.b16 %v338
    %v407 = vunpack.c.l.b16 %v339
    %v408 = vpack.c.b16 %v377, %v376
    %v409 = vpack.c.b16 %v379, %v378
    %v410 = vpack.c.b16 %v381, %v380
    %v411 = vpack.c.b16 %v383, %v382
    %v412 = vpack.c.b16 %v385, %v384
    %v413 = vpack.c.b16 %v387, %v386
    %v414 = vpack.c.b16 %v389, %v388
    %v415 = vpack.c.b16 %v391, %v390
    %v416 = vpack.c.b16 %v393, %v392
    %v417 = vpack.c.b16 %v395, %v394
    %v418 = vpack.c.b16 %v397, %v396
    %v419 = vpack.c.b16 %v399, %v398
    %v420 = vpack.c.b16 %v401, %v400
    %v421 = vpack.c.b16 %v403, %v402
    %v422 = vpack.c.b16 %v405, %v404
    %v423 = vpack.c.b16 %v407, %v406
    %440 = vmatpush.bf16.msra.mxu0 %v415
    %441 = vmatpush.bf16.msra.mxu0 %v414
    %442 = vmatpush.bf16.msra.mxu0 %v413
    %443 = vmatpush.bf16.msra.mxu0 %v412
    %444 = vmatpush.bf16.msra.mxu0 %v411
    %445 = vmatpush.bf16.msra.mxu0 %v410
    %446 = vmatpush.bf16.msra.mxu0 %v409
    %447 = vmatpush.bf16.msra.mxu0 %v408
    %448 = vmatmul.bf16.gmra.mxu0 %v300
    %v449 = vpop.f32.mrf.mxu0
    %v450 = vadd.f32 %v342, %v449
    %v451 = vpop.f32.mrf.mxu0
    %v452 = vadd.f32 %v342, %v451
    %453 = vdwg.mxu0
    %454 = vmatpush.bf16.msra.mxu0 %v423
    %455 = vmatpush.bf16.msra.mxu0 %v422
    %456 = vmatpush.bf16.msra.mxu0 %v421
    %457 = vmatpush.bf16.msra.mxu0 %v420
    %458 = vmatpush.bf16.msra.mxu0 %v419
    %459 = vmatpush.bf16.msra.mxu0 %v418
    %460 = vmatpush.bf16.msra.mxu0 %v417
    %461 = vmatpush.bf16.msra.mxu0 %v416
    %462 = vmatmul.bf16.gmra.mxu0 %v306
    %v463 = vpop.f32.mrf.mxu0
    %v464 = vadd.f32 %v450, %v463
    %v465 = vpop.f32.mrf.mxu0
    %v466 = vadd.f32 %v452, %v465
    %467 = vdwg.mxu0
    %v468 = vlaneseq
    %v469 = vand.u32 %v468, 127
    %vm470 = vcmp.lt.s32.totalorder %v469, 16
    %v471 = vsel %vm470, %v464, -inf
    %v472 = vsel %vm470, %v466, -inf
    %473 = vmax.xlane.f32.xlu0 %v471
    %v474 = vpop.xlane.xlu0 %473
    %475 = vmax.xlane.f32.xlu0 %v472
    %v476 = vpop.xlane.xlu0 %475
    %vm477 = vcmp.eq.f32.partialorder %v471, %v474
    %vm478 = vcmp.eq.f32.partialorder %v472, %v476
    %v479 = vsel %vm477, %v469, 128
    %v480 = vsel %vm478, %v469, 128
    %v481 = vand.u32 %v479, 65535
    %v482 = vshra.s32 %v479, 16
    %v483 = vcvt.s32.f32 %v481
    %v484 = vcvt.s32.f32 %v482
    %485 = vmin.xlane.f32.xlu0 %v484
    %v486 = vpop.xlane.xlu0 %485
    %vm487 = vcmp.eq.f32.partialorder %v484, %v486
    %v488 = vsel %vm487, %v483, inf
    %489 = vmin.xlane.f32.xlu0 %v488
    %v490 = vpop.xlane.xlu0 %489
    %v491 = vcvt.f32.s32 %v490
    %v492 = vcvt.f32.s32 %v486
    %v493 = vshll.u32 %v492, 16
    %v494 = vadd.s32 %v493, %v491
    %v495 = vand.u32 %v480, 65535
    %v496 = vshra.s32 %v480, 16
    %v497 = vcvt.s32.f32 %v495
    %v498 = vcvt.s32.f32 %v496
    %499 = vmin.xlane.f32.xlu0 %v498
    %v500 = vpop.xlane.xlu0 %499
    %vm501 = vcmp.eq.f32.partialorder %v498, %v500
    %v502 = vsel %vm501, %v497, inf
    %503 = vmin.xlane.f32.xlu0 %v502
    %v504 = vpop.xlane.xlu0 %503
    %v505 = vcvt.f32.s32 %v504
    %v506 = vcvt.f32.s32 %v500
    %v507 = vshll.u32 %v506, 16
    %v508 = vadd.s32 %v507, %v505
    %vm509 = vcmask 7168
    %510 = vst.msk [vmem:[%s8] sm:$0xff] %vm509, %v494
    %511 = vst.msk [vmem:[%s8 + $0x8] sm:$0xff] %vm509, %v508
    // Predicated region
    $region54: #{tpu_custom_call.1} parent=1 // pred_check
      _
    $region55: #{tpu_custom_call.1} parent=1 // pred_check_branch
      %513 = sbr.rel (0) target = $region57
    $region56: #{tpu_custom_call.1} parent=1 // pred_region
      _
    $region57: #{tpu_custom_call.1} parent=1 // pred_fallthru
      _
    // Predicated region
    $region58: #{tpu_custom_call.1} parent=1 // pred_check
      _
    $region59: #{tpu_custom_call.1} parent=1 // pred_check_branch
      %515 = sbr.rel (0) target = $region61
    $region60: #{tpu_custom_call.1} parent=1 // pred_region
      _
    $region61: #{tpu_custom_call.1} parent=1 // pred_fallthru
      _
    %516 = vsyncpa [#allocation3], 1
    %517 = vsyncpa [#allocation5], 1
    %518 = vsyncpa [#allocation8], 1

// kernel: tpu_custom_call.1
$region0: #{tpu_custom_call.1}
  #allocation0 [shape = 'u32[]', space=smem, size = 0x4, offset = 0x4, fixed_abs, tag = 'smem constant byte address 0x4 - core index']
  #allocation1 [shape = 'u32[72,128]{1,0:T(1,128)}', space=vmem, size = 0x9000, scoped, tag = 'internal scratch']
  %s0 = inlined_call_operand.hbm [shape: bf16[16,128], index: 0, kind: input, shape index: {}]
  %s1 = inlined_call_operand.hbm [shape: bf16[16,128], index: 1, kind: input, shape index: {}]
  %s2 = inlined_call_operand.hbm [shape: bf16[128,128], index: 2, kind: input, shape index: {}]
  %s3 = inlined_call_operand.vmem [shape: f32[1,128], index: 3, kind: input, shape index: {}]
  %s4 = inlined_call_operand.hbm [shape: bf16[128,128], index: 4, kind: input, shape index: {}]
  %s5 = inlined_call_operand.vmem [shape: f32[1,128], index: 5, kind: input, shape index: {}]
  %s6 = inlined_call_operand.hbm [shape: bf16[256,128], index: 6, kind: input, shape index: {}]
  %s7 = inlined_call_operand.vmem [shape: f32[1,128], index: 7, kind: input, shape index: {}]
  %s8 = inlined_call_operand.vmem [shape: s32[16,1], index: 8, kind: output, shape index: {}]
  %s9 = sld [smem:[#allocation0]]
  $region62: #{tpu_custom_call.1} parent=0
    _
  %s11 = ssub.s32 1, %s9
  %s12 = scalar_select 0, %s11, %s9
  $region1: #{tpu_custom_call.1} parent=0
    #allocation2 [shape = 'u8[4096]{0}', space=vmem, size = 0x1000, scoped, tag = 'input window, operand 0, single buffered']
    #allocation3 [shape = 's32[1]{0}', space=sflag, size = 0x4, scoped, tag = 'scoped memory for tpu_custom_call.1']
    #allocation4 [shape = 'u8[4096]{0}', space=vmem, size = 0x1000, scoped, tag = 'input window, operand 1, single buffered']
    #allocation5 [shape = 's32[1]{0}', space=sflag, size = 0x4, scoped, tag = 'scoped memory for tpu_custom_call.1']
    #allocation6 [shape = 'u8[32768]{0}', space=vmem, size = 0x8000, scoped, tag = 'input window, operand 2, single buffered']
    #allocation7 [shape = 'u8[32768]{0}', space=vmem, size = 0x8000, scoped, tag = 'input window, operand 4, single buffered']
    #allocation8 [shape = 's32[1]{0}', space=sflag, size = 0x4, scoped, tag = 'scoped memory for tpu_custom_call.1']
    #allocation9 [shape = 'u8[65536]{0}', space=vmem, size = 0x10000, scoped, tag = 'input window, operand 6, single buffered']
    %13 = vsyncpa [#allocation3], 0
    %14 = vsyncpa [#allocation5], 0
    %15 = vsyncpa [#allocation8], 0
    // Predicated region
    $region2: #{tpu_custom_call.1} parent=1 // pred_check
      _
    $region3: #{tpu_custom_call.1} parent=1 // pred_check_branch
      %17 = sbr.rel (0) target = $region5
    $region4: #{tpu_custom_call.1} parent=1 // pred_region
      %19 = vsyncadd [#allocation3], 0
      %s20 = sshll.u32 %s0, 4
      %s21 = int_to_ptr.hbm [resolvable:$true] %s20
      %s22 = sshll.u32 [#allocation2], 4
      %s23 = int_to_ptr.vmem [resolvable:$true] %s22
      %28 = dma.hbm_to_vmem [thread:$0]  %s21, 128, %s23, [#allocation3], 64, 64, 4
    $region5: #{tpu_custom_call.1} parent=1 // pred_fallthru
      _
    // Predicated region
    $region6: #{tpu_custom_call.1} parent=1 // pred_check
      _
    $region7: #{tpu_custom_call.1} parent=1 // pred_check_branch
      %30 = sbr.rel (0) target = $region9
    $region8: #{tpu_custom_call.1} parent=1 // pred_region
      %32 = vsyncadd [#allocation5], 0
      %s33 = sshll.u32 %s1, 4
      %s34 = int_to_ptr.hbm [resolvable:$true] %s33
      %s35 = sshll.u32 [#allocation4], 4
      %s36 = int_to_ptr.vmem [resolvable:$true] %s35
      %41 = dma.hbm_to_vmem [thread:$0]  %s34, 128, %s36, [#allocation5], 64, 64, 4
    $region9: #{tpu_custom_call.1} parent=1 // pred_fallthru
      _
    // Predicated region
    $region10: #{tpu_custom_call.1} parent=1 // pred_check
      _
    $region11: #{tpu_custom_call.1} parent=1 // pred_check_branch
      %43 = sbr.rel (0) target = $region13
    $region12: #{tpu_custom_call.1} parent=1 // pred_region
      %45 = vsyncadd [#allocation5], 0
      %s46 = sshll.u32 %s2, 4
      %s47 = int_to_ptr.hbm [resolvable:$true] %s46
      %s48 = sshll.u32 [#allocation6], 4
      %s49 = int_to_ptr.vmem [resolvable:$true] %s48
      %54 = dma.hbm_to_vmem [thread:$0]  %s47, 1024, %s49, [#allocation5], 64, 64, 4
    $region13: #{tpu_custom_call.1} parent=1 // pred_fallthru
      _
    // Predicated region
    $region14: #{tpu_custom_call.1} parent=1 // pred_check
      _
    $region15: #{tpu_custom_call.1} parent=1 // pred_check_branch
      %56 = sbr.rel (0) target = $region17
    $region16: #{tpu_custom_call.1} parent=1 // pred_region
      _
    $region17: #{tpu_custom_call.1} parent=1 // pred_fallthru
      _
    // Predicated region
    $region18: #{tpu_custom_call.1} parent=1 // pred_check
      _
    $region19: #{tpu_custom_call.1} parent=1 // pred_check_branch
      %58 = sbr.rel (0) target = $region21
    $region20: #{tpu_custom_call.1} parent=1 // pred_region
      %60 = vsyncadd [#allocation8], 0
      %s61 = sshll.u32 %s4, 4
      %s62 = int_to_ptr.hbm [resolvable:$true] %s61
      %s63 = sshll.u32 [#allocation7], 4
      %s64 = int_to_ptr.vmem [resolvable:$true] %s63
      %69 = dma.hbm_to_vmem [thread:$0]  %s62, 1024, %s64, [#allocation8], 64, 64, 4
    $region21: #{tpu_custom_call.1} parent=1 // pred_fallthru
      _
    // Predicated region
    $region22: #{tpu_custom_call.1} parent=1 // pred_check
      _
    $region23: #{tpu_custom_call.1} parent=1 // pred_check_branch
      %71 = sbr.rel (0) target = $region25
    $region24: #{tpu_custom_call.1} parent=1 // pred_region
      _
    $region25: #{tpu_custom_call.1} parent=1 // pred_fallthru
      _
    // Predicated region
    $region26: #{tpu_custom_call.1} parent=1 // pred_check
      _
    $region27: #{tpu_custom_call.1} parent=1 // pred_check_branch
      %73 = sbr.rel (0) target = $region29
    $region28: #{tpu_custom_call.1} parent=1 // pred_region
      %75 = vsyncadd [#allocation8], 0
      %s76 = sshll.u32 %s6, 4
      %s77 = int_to_ptr.hbm [resolvable:$true] %s76
      %s78 = sshll.u32 [#allocation9], 4
      %s79 = int_to_ptr.vmem [resolvable:$true] %s78
      %84 = dma.hbm_to_vmem [thread:$0]  %s77, 2048, %s79, [#allocation8], 64, 64, 4
    $region29: #{tpu_custom_call.1} parent=1 // pred_fallthru
      _
    // Predicated region
    $region30: #{tpu_custom_call.1} parent=1 // pred_check
      _
    $region31: #{tpu_custom_call.1} parent=1 // pred_check_branch
      %86 = sbr.rel (0) target = $region33
    $region32: #{tpu_custom_call.1} parent=1 // pred_region
      _
    $region33: #{tpu_custom_call.1} parent=1 // pred_fallthru
      _
    // Predicated region
    $region34: #{tpu_custom_call.1} parent=1 // pred_check
      _
    $region35: #{tpu_custom_call.1} parent=1 // pred_check_branch
      %88 = sbr.rel (0) target = $region37
    $region36: #{tpu_custom_call.1} parent=1 // pred_region
      %90 = dma.done [#allocation3], 128
    $region37: #{tpu_custom_call.1} parent=1 // pred_fallthru
      _
    // Predicated region
    $region38: #{tpu_custom_call.1} parent=1 // pred_check
      _
    $region39: #{tpu_custom_call.1} parent=1 // pred_check_branch
      %92 = sbr.rel (0) target = $region41
    $region40: #{tpu_custom_call.1} parent=1 // pred_region
      %94 = dma.done [#allocation5], 128
    $region41: #{tpu_custom_call.1} parent=1 // pred_fallthru
      _
    // Predicated region
    $region42: #{tpu_custom_call.1} parent=1 // pred_check
      _
    $region43: #{tpu_custom_call.1} parent=1 // pred_check_branch
      %96 = sbr.rel (0) target = $region45
    $region44: #{tpu_custom_call.1} parent=1 // pred_region
      %98 = dma.done [#allocation5], 1024
    $region45: #{tpu_custom_call.1} parent=1 // pred_fallthru
      _
    // Predicated region
    $region46: #{tpu_custom_call.1} parent=1 // pred_check
      _
    $region47: #{tpu_custom_call.1} parent=1 // pred_check_branch
      %100 = sbr.rel (0) target = $region49
    $region48: #{tpu_custom_call.1} parent=1 // pred_region
      %102 = dma.done [#allocation8], 1024
    $region49: #{tpu_custom_call.1} parent=1 // pred_fallthru
      _
    // Predicated region
    $region50: #{tpu_custom_call.1} parent=1 // pred_check
      _
    $region51: #{tpu_custom_call.1} parent=1 // pred_check_branch
      %104 = sbr.rel (0) target = $region53
    $region52: #{tpu_custom_call.1} parent=1 // pred_region
      %106 = dma.done [#allocation8], 2048
    $region53: #{tpu_custom_call.1} parent=1 // pred_fallthru
      _
    %v107 = vld [vmem:[#allocation4] sm:$0xf]
    %v108 = vld [vmem:[#allocation4 + $0x4] sm:$0xf]
    %v109 = vld [vmem:[#allocation6] sm:$0xf]
    %v110 = vld [vmem:[#allocation6 + $0x4] sm:$0xf]
    %v111 = vld [vmem:[#allocation6 + $0x8] sm:$0xf]
    %v112 = vld [vmem:[#allocation6 + $0xc] sm:$0xf]
    %v113 = vld [vmem:[#allocation6 + $0x10] sm:$0xf]
    %v114 = vld [vmem:[#allocation6 + $0x14] sm:$0xf]
    %v115 = vld [vmem:[#allocation6 + $0x18] sm:$0xf]
    %v116 = vld [vmem:[#allocation6 + $0x1c] sm:$0xf]
    %v117 = vld [vmem:[#allocation6 + $0x20] sm:$0xf]
    %v118 = vld [vmem:[#allocation6 + $0x24] sm:$0xf]
    %v119 = vld [vmem:[#allocation6 + $0x28] sm:$0xf]
    %v120 = vld [vmem:[#allocation6 + $0x2c] sm:$0xf]
    %v121 = vld [vmem:[#allocation6 + $0x30] sm:$0xf]
    %v122 = vld [vmem:[#allocation6 + $0x34] sm:$0xf]
    %v123 = vld [vmem:[#allocation6 + $0x38] sm:$0xf]
    %v124 = vld [vmem:[#allocation6 + $0x3c] sm:$0xf]
    %v125 = vld [vmem:[%s3] sm:$0x1]
    %v127 = vperm.slane %v125, 0
    %v131 = vunpack.c.l.b16 %v107
    %v132 = vunpack.c.l.b16 %v108
    %v133 = vpack.c.b16 %v132, %v131
    %v151 = vunpack.c.l.b16 %v109
    %v152 = vunpack.c.l.b16 %v110
    %v153 = vunpack.c.l.b16 %v111
    %v154 = vunpack.c.l.b16 %v112
    %v155 = vunpack.c.l.b16 %v113
    %v156 = vunpack.c.l.b16 %v114
    %v157 = vunpack.c.l.b16 %v115
    %v158 = vunpack.c.l.b16 %v116
    %v159 = vunpack.c.l.b16 %v117
    %v160 = vunpack.c.l.b16 %v118
    %v161 = vunpack.c.l.b16 %v119
    %v162 = vunpack.c.l.b16 %v120
    %v163 = vunpack.c.l.b16 %v121
    %v164 = vunpack.c.l.b16 %v122
    %v165 = vunpack.c.l.b16 %v123
    %v166 = vunpack.c.l.b16 %v124
    %v167 = vpack.c.b16 %v152, %v151
    %v168 = vpack.c.b16 %v154, %v153
    %v169 = vpack.c.b16 %v156, %v155
    %v170 = vpack.c.b16 %v158, %v157
    %v171 = vpack.c.b16 %v160, %v159
    %v172 = vpack.c.b16 %v162, %v161
    %v173 = vpack.c.b16 %v164, %v163
    %v174 = vpack.c.b16 %v166, %v165
    %183 = vmatpush.bf16.msra.mxu0 %v174
    %184 = vmatpush.bf16.msra.mxu0 %v173
    %185 = vmatpush.bf16.msra.mxu0 %v172
    %186 = vmatpush.bf16.msra.mxu0 %v171
    %187 = vmatpush.bf16.msra.mxu0 %v170
    %188 = vmatpush.bf16.msra.mxu0 %v169
    %189 = vmatpush.bf16.msra.mxu0 %v168
    %190 = vmatpush.bf16.msra.mxu0 %v167
    %191 = vmatmul.bf16.gmra.mxu0 %v133
    %v192 = vpop.f32.mrf.mxu0
    %v193 = vadd.f32 %v127, %v192
    %v194 = vpop.f32.mrf.mxu0
    %v195 = vadd.f32 %v127, %v194
    %196 = vdwg.mxu0
    %vm197 = vcmp.gt.f32.partialorder %v193, 0.0
    %vm198 = vcmp.gt.f32.partialorder %v195, 0.0
    %v199 = vmul.f32 %v193, 0.01
    %v200 = vmul.f32 %v195, 0.01
    %v201 = vsel %vm197, %v193, %v199
    %v202 = vsel %vm198, %v195, %v200
    %v203 = vpack.c.bf16 %v202, %v201
    %v204 = vld [vmem:[#allocation7] sm:$0xf]
    %v205 = vld [vmem:[#allocation7 + $0x4] sm:$0xf]
    %v206 = vld [vmem:[#allocation7 + $0x8] sm:$0xf]
    %v207 = vld [vmem:[#allocation7 + $0xc] sm:$0xf]
    %v208 = vld [vmem:[#allocation7 + $0x10] sm:$0xf]
    %v209 = vld [vmem:[#allocation7 + $0x14] sm:$0xf]
    %v210 = vld [vmem:[#allocation7 + $0x18] sm:$0xf]
    %v211 = vld [vmem:[#allocation7 + $0x1c] sm:$0xf]
    %v212 = vld [vmem:[#allocation7 + $0x20] sm:$0xf]
    %v213 = vld [vmem:[#allocation7 + $0x24] sm:$0xf]
    %v214 = vld [vmem:[#allocation7 + $0x28] sm:$0xf]
    %v215 = vld [vmem:[#allocation7 + $0x2c] sm:$0xf]
    %v216 = vld [vmem:[#allocation7 + $0x30] sm:$0xf]
    %v217 = vld [vmem:[#allocation7 + $0x34] sm:$0xf]
    %v218 = vld [vmem:[#allocation7 + $0x38] sm:$0xf]
    %v219 = vld [vmem:[#allocation7 + $0x3c] sm:$0xf]
    %v220 = vld [vmem:[%s5] sm:$0x1]
    %v222 = vperm.slane %v220, 0
    %v240 = vunpack.c.l.b16 %v204
    %v241 = vunpack.c.l.b16 %v205
    %v242 = vunpack.c.l.b16 %v206
    %v243 = vunpack.c.l.b16 %v207
    %v244 = vunpack.c.l.b16 %v208
    %v245 = vunpack.c.l.b16 %v209
    %v246 = vunpack.c.l.b16 %v210
    %v247 = vunpack.c.l.b16 %v211
    %v248 = vunpack.c.l.b16 %v212
    %v249 = vunpack.c.l.b16 %v213
    %v250 = vunpack.c.l.b16 %v214
    %v251 = vunpack.c.l.b16 %v215
    %v252 = vunpack.c.l.b16 %v216
    %v253 = vunpack.c.l.b16 %v217
    %v254 = vunpack.c.l.b16 %v218
    %v255 = vunpack.c.l.b16 %v219
    %v256 = vpack.c.b16 %v241, %v240
    %v257 = vpack.c.b16 %v243, %v242
    %v258 = vpack.c.b16 %v245, %v244
    %v259 = vpack.c.b16 %v247, %v246
    %v260 = vpack.c.b16 %v249, %v248
    %v261 = vpack.c.b16 %v251, %v250
    %v262 = vpack.c.b16 %v253, %v252
    %v263 = vpack.c.b16 %v255, %v254
    %272 = vmatpush.bf16.msra.mxu0 %v263
    %273 = vmatpush.bf16.msra.mxu0 %v262
    %274 = vmatpush.bf16.msra.mxu0 %v261
    %275 = vmatpush.bf16.msra.mxu0 %v260
    %276 = vmatpush.bf16.msra.mxu0 %v259
    %277 = vmatpush.bf16.msra.mxu0 %v258
    %278 = vmatpush.bf16.msra.mxu0 %v257
    %279 = vmatpush.bf16.msra.mxu0 %v256
    %280 = vmatmul.bf16.gmra.mxu0 %v203
    %v281 = vpop.f32.mrf.mxu0
    %v282 = vadd.f32 %v222, %v281
    %v283 = vpop.f32.mrf.mxu0
    %v284 = vadd.f32 %v222, %v283
    %285 = vdwg.mxu0
    %vm286 = vcmp.gt.f32.partialorder %v282, 0.0
    %vm287 = vcmp.gt.f32.partialorder %v284, 0.0
    %v288 = vmul.f32 %v282, 0.01
    %v289 = vmul.f32 %v284, 0.01
    %v290 = vsel %vm286, %v282, %v288
    %v291 = vsel %vm287, %v284, %v289
    %v292 = vpack.c.bf16 %v290, %v290
    %v293 = vpack.c.bf16 %v291, %v291
    %v294 = vld [vmem:[#allocation2] sm:$0xf]
    %v295 = vld [vmem:[#allocation2 + $0x4] sm:$0xf]
    %v298 = vunpack.c.l.b16 %v292
    %v299 = vunpack.c.l.b16 %v293
    %v300 = vpack.c.b16 %v299, %v298
    %v304 = vunpack.c.l.b16 %v294
    %v305 = vunpack.c.l.b16 %v295
    %v306 = vpack.c.b16 %v305, %v304
    %v308 = vld [vmem:[#allocation9] sm:$0xf]
    %v309 = vld [vmem:[#allocation9 + $0x4] sm:$0xf]
    %v310 = vld [vmem:[#allocation9 + $0x8] sm:$0xf]
    %v311 = vld [vmem:[#allocation9 + $0xc] sm:$0xf]
    %v312 = vld [vmem:[#allocation9 + $0x10] sm:$0xf]
    %v313 = vld [vmem:[#allocation9 + $0x14] sm:$0xf]
    %v314 = vld [vmem:[#allocation9 + $0x18] sm:$0xf]
    %v315 = vld [vmem:[#allocation9 + $0x1c] sm:$0xf]
    %v316 = vld [vmem:[#allocation9 + $0x20] sm:$0xf]
    %v317 = vld [vmem:[#allocation9 + $0x24] sm:$0xf]
    %v318 = vld [vmem:[#allocation9 + $0x28] sm:$0xf]
    %v319 = vld [vmem:[#allocation9 + $0x2c] sm:$0xf]
    %v320 = vld [vmem:[#allocation9 + $0x30] sm:$0xf]
    %v321 = vld [vmem:[#allocation9 + $0x34] sm:$0xf]
    %v322 = vld [vmem:[#allocation9 + $0x38] sm:$0xf]
    %v323 = vld [vmem:[#allocation9 + $0x3c] sm:$0xf]
    %v324 = vld [vmem:[#allocation9 + $0x40] sm:$0xf]
    %v325 = vld [vmem:[#allocation9 + $0x44] sm:$0xf]
    %v326 = vld [vmem:[#allocation9 + $0x48] sm:$0xf]
    %v327 = vld [vmem:[#allocation9 + $0x4c] sm:$0xf]
    %v328 = vld [vmem:[#allocation9 + $0x50] sm:$0xf]
    %v329 = vld [vmem:[#allocation9 + $0x54] sm:$0xf]
    %v330 = vld [vmem:[#allocation9 + $0x58] sm:$0xf]
    %v331 = vld [vmem:[#allocation9 + $0x5c] sm:$0xf]
    %v332 = vld [vmem:[#allocation9 + $0x60] sm:$0xf]
    %v333 = vld [vmem:[#allocation9 + $0x64] sm:$0xf]
    %v334 = vld [vmem:[#allocation9 + $0x68] sm:$0xf]
    %v335 = vld [vmem:[#allocation9 + $0x6c] sm:$0xf]
    %v336 = vld [vmem:[#allocation9 + $0x70] sm:$0xf]
    %v337 = vld [vmem:[#allocation9 + $0x74] sm:$0xf]
    %v338 = vld [vmem:[#allocation9 + $0x78] sm:$0xf]
    %v339 = vld [vmem:[#allocation9 + $0x7c] sm:$0xf]
    %v340 = vld [vmem:[%s7] sm:$0x1]
    %v342 = vperm.slane %v340, 0
    %v376 = vunpack.c.l.b16 %v308
    %v377 = vunpack.c.l.b16 %v309
    %v378 = vunpack.c.l.b16 %v310
    %v379 = vunpack.c.l.b16 %v311
    %v380 = vunpack.c.l.b16 %v312
    %v381 = vunpack.c.l.b16 %v313
    %v382 = vunpack.c.l.b16 %v314
    %v383 = vunpack.c.l.b16 %v315
    %v384 = vunpack.c.l.b16 %v316
    %v385 = vunpack.c.l.b16 %v317
    %v386 = vunpack.c.l.b16 %v318
    %v387 = vunpack.c.l.b16 %v319
    %v388 = vunpack.c.l.b16 %v320
    %v389 = vunpack.c.l.b16 %v321
    %v390 = vunpack.c.l.b16 %v322
    %v391 = vunpack.c.l.b16 %v323
    %v392 = vunpack.c.l.b16 %v324
    %v393 = vunpack.c.l.b16 %v325
    %v394 = vunpack.c.l.b16 %v326
    %v395 = vunpack.c.l.b16 %v327
    %v396 = vunpack.c.l.b16 %v328
    %v397 = vunpack.c.l.b16 %v329
    %v398 = vunpack.c.l.b16 %v330
    %v399 = vunpack.c.l.b16 %v331
    %v400 = vunpack.c.l.b16 %v332
    %v401 = vunpack.c.l.b16 %v333
    %v402 = vunpack.c.l.b16 %v334
    %v403 = vunpack.c.l.b16 %v335
    %v404 = vunpack.c.l.b16 %v336
    %v405 = vunpack.c.l.b16 %v337
    %v406 = vunpack.c.l.b16 %v338
    %v407 = vunpack.c.l.b16 %v339
    %v408 = vpack.c.b16 %v377, %v376
    %v409 = vpack.c.b16 %v379, %v378
    %v410 = vpack.c.b16 %v381, %v380
    %v411 = vpack.c.b16 %v383, %v382
    %v412 = vpack.c.b16 %v385, %v384
    %v413 = vpack.c.b16 %v387, %v386
    %v414 = vpack.c.b16 %v389, %v388
    %v415 = vpack.c.b16 %v391, %v390
    %v416 = vpack.c.b16 %v393, %v392
    %v417 = vpack.c.b16 %v395, %v394
    %v418 = vpack.c.b16 %v397, %v396
    %v419 = vpack.c.b16 %v399, %v398
    %v420 = vpack.c.b16 %v401, %v400
    %v421 = vpack.c.b16 %v403, %v402
    %v422 = vpack.c.b16 %v405, %v404
    %v423 = vpack.c.b16 %v407, %v406
    %440 = vmatpush.bf16.msra.mxu0 %v415
    %441 = vmatpush.bf16.msra.mxu0 %v414
    %442 = vmatpush.bf16.msra.mxu0 %v413
    %443 = vmatpush.bf16.msra.mxu0 %v412
    %444 = vmatpush.bf16.msra.mxu0 %v411
    %445 = vmatpush.bf16.msra.mxu0 %v410
    %446 = vmatpush.bf16.msra.mxu0 %v409
    %447 = vmatpush.bf16.msra.mxu0 %v408
    %448 = vmatmul.bf16.gmra.mxu0 %v300
    %v449 = vpop.f32.mrf.mxu0
    %v450 = vadd.f32 %v342, %v449
    %v451 = vpop.f32.mrf.mxu0
    %v452 = vadd.f32 %v342, %v451
    %453 = vdwg.mxu0
    %454 = vmatpush.bf16.msra.mxu0 %v423
    %455 = vmatpush.bf16.msra.mxu0 %v422
    %456 = vmatpush.bf16.msra.mxu0 %v421
    %457 = vmatpush.bf16.msra.mxu0 %v420
    %458 = vmatpush.bf16.msra.mxu0 %v419
    %459 = vmatpush.bf16.msra.mxu0 %v418
    %460 = vmatpush.bf16.msra.mxu0 %v417
    %461 = vmatpush.bf16.msra.mxu0 %v416
    %462 = vmatmul.bf16.gmra.mxu0 %v306
    %v463 = vpop.f32.mrf.mxu0
    %v464 = vadd.f32 %v450, %v463
    %v465 = vpop.f32.mrf.mxu0
    %v466 = vadd.f32 %v452, %v465
    %467 = vdwg.mxu0
    %v468 = vlaneseq
    %v469 = vand.u32 %v468, 127
    %vm470 = vcmp.lt.s32.totalorder %v469, 16
    %v471 = vsel %vm470, %v464, -inf
    %v472 = vsel %vm470, %v466, -inf
    %473 = vmax.xlane.f32.xlu0 %v471
    %v474 = vpop.xlane.xlu0 %473
    %475 = vmax.xlane.f32.xlu0 %v472
    %v476 = vpop.xlane.xlu0 %475
    %vm477 = vcmp.eq.f32.partialorder %v471, %v474
    %vm478 = vcmp.eq.f32.partialorder %v472, %v476
    %v479 = vsel %vm477, %v469, 128
    %v480 = vsel %vm478, %v469, 128
    %v481 = vand.u32 %v479, 65535
    %v482 = vshra.s32 %v479, 16
    %v483 = vcvt.s32.f32 %v481
    %v484 = vcvt.s32.f32 %v482
    %485 = vmin.xlane.f32.xlu0 %v484
    %v486 = vpop.xlane.xlu0 %485
    %vm487 = vcmp.eq.f32.partialorder %v484, %v486
    %v488 = vsel %vm487, %v483, inf
    %489 = vmin.xlane.f32.xlu0 %v488
    %v490 = vpop.xlane.xlu0 %489
    %v491 = vcvt.f32.s32 %v490
    %v492 = vcvt.f32.s32 %v486
    %v493 = vshll.u32 %v492, 16
    %v494 = vadd.s32 %v493, %v491
    %v495 = vand.u32 %v480, 65535
    %v496 = vshra.s32 %v480, 16
    %v497 = vcvt.s32.f32 %v495
    %v498 = vcvt.s32.f32 %v496
    %499 = vmin.xlane.f32.xlu0 %v498
    %v500 = vpop.xlane.xlu0 %499
    %vm501 = vcmp.eq.f32.partialorder %v498, %v500
    %v502 = vsel %vm501, %v497, inf
    %503 = vmin.xlane.f32.xlu0 %v502
    %v504 = vpop.xlane.xlu0 %503
    %v505 = vcvt.f32.s32 %v504
    %v506 = vcvt.f32.s32 %v500
    %v507 = vshll.u32 %v506, 16
    %v508 = vadd.s32 %v507, %v505
    %vm509 = vcmask 7168
    %510 = vst.msk [vmem:[%s8] sm:$0xff] %vm509, %v494
    %511 = vst.msk [vmem:[%s8 + $0x8] sm:$0xff] %vm509, %v508
    // Predicated region
    $region54: #{tpu_custom_call.1} parent=1 // pred_check
      _
    $region55: #{tpu_custom_call.1} parent=1 // pred_check_branch
      %513 = sbr.rel (0) target = $region57
    $region56: #{tpu_custom_call.1} parent=1 // pred_region
      _
    $region57: #{tpu_custom_call.1} parent=1 // pred_fallthru
      _
    // Predicated region
    $region58: #{tpu_custom_call.1} parent=1 // pred_check
      _
    $region59: #{tpu_custom_call.1} parent=1 // pred_check_branch
      %515 = sbr.rel (0) target = $region61
    $region60: #{tpu_custom_call.1} parent=1 // pred_region
      _
    $region61: #{tpu_custom_call.1} parent=1 // pred_fallthru
      _
    %516 = vsyncpa [#allocation3], 1
    %517 = vsyncpa [#allocation5], 1
    %518 = vsyncpa [#allocation8], 1

</llo_original>
